<compile_context>
chip_gen: v7x
topology: tpu7x:2x2x1
jax: 0.10.0
libtpu: 0.0.40
codegen_flags: <defaults>
</compile_context>

<pallas_src>
import jax
import jax.numpy as jnp
from jax.experimental import pallas as pl
from jax.experimental.pallas import tpu as pltpu

OUT_DIM = 1024


# ---------------------------------------------------------------------------
# Kernel
# ---------------------------------------------------------------------------
def _fphead_kernel(x_ref, w_ref, b_ref, o_ref, acc_ref):
    # x_ref: (tm, tk)  w_ref: (tk, tn)  b_ref: (1, tn)  o_ref: (tm, tn)
    k = pl.program_id(2)

    @pl.when(k == 0)
    def _():
        acc_ref[...] = jnp.zeros_like(acc_ref)

    # [tm, tk] @ [tk, tn] -> f32 accumulate on the MXU (lane-dense RHS).
    acc_ref[...] += jnp.dot(
        x_ref[...], w_ref[...], preferred_element_type=jnp.float32
    )

    @pl.when(k == pl.num_programs(2) - 1)
    def _():
        o_ref[...] = (acc_ref[...] + b_ref[...]).astype(o_ref.dtype)


# ---------------------------------------------------------------------------
# Tiling / VMEM budgeting helpers
# ---------------------------------------------------------------------------
def _round_up(x, m):
    return (x + m - 1) // m * m


def _vmem_capacity_bytes():
    try:
        info = pltpu.get_tpu_info()
        cap = getattr(info, "vmem_capacity_bytes", None)
        if cap:
            return int(cap)
    except Exception:
        pass
    return 64 << 20  # conservative: v7x physical VMEM per TensorCore


def _select_tiles(M, K, N, budget, out_itemsize):
    """Pick (tm, tk, tn) so double-buffered tiles + accumulator fit `budget`."""
    # K tiling: keep full K when modest; otherwise largest 128-multiple divisor
    # (lane dim of the x block must be a multiple of 128 or the full extent).
    tk = K
    if K > 2048:
        for c in (2048, 1024, 512, 256, 128):
            if K % c == 0:
                tk = c
                break
    m_cap = _round_up(M, 8)
    tn_candidates = list(dict.fromkeys(
        c for c in (N, 1024, 512, 256, 128) if c <= N and N % c == 0
    ))
    for tn in tn_candidates:                      # prefer resident full-N weight
        for tm in (2048, 1024, 512, 256, 128, 64, 32, 16, 8):
            if tm > m_cap:
                continue
            fixed = 4 * (tk * tn + tn)            # weight tile + bias (f32)
            per_m = 4 * tm * tk + out_itemsize * tm * tn
            need = 2 * (fixed + per_m) + 4 * tm * tn   # double-buffer + acc
            if need <= budget:
                return tm, tk, tn
    # Last resort: smallest legal tiles.
    return 8, tk, (128 if N % 128 == 0 else N)


# ---------------------------------------------------------------------------
# Parameter prep (one-time) + forward
# ---------------------------------------------------------------------------
def prepare_fphead_params(weight, bias):
    """One-time at param load: torch nn.Linear [N, K] weight -> MXU [K, N]."""
    w_t = jnp.asarray(weight).T                    # [K, N], lane-dense on N
    b2 = jnp.asarray(bias).reshape(1, -1)          # [1, N]
    return w_t, b2


def fphead_forward(x, w_t, bias2, *, out_dtype=None):
    """x: [B, L, K]; w_t: [K, N] (pre-transposed); bias2: [1, N]."""
    B, L, K = x.shape
    Kw, N = w_t.shape
    assert Kw == K and bias2.shape == (1, N)
    # TODO(synk): set out_dtype=jnp.bfloat16 if downstream tolerates it — this
    # kernel is output-writeback-bound and bf16 halves the dominant HBM write.
    out_dtype = x.dtype if out_dtype is None else jnp.dtype(out_dtype)
    out_itemsize = jnp.dtype(out_dtype).itemsize

    M = B * L
    x2 = x.reshape(M, K)

    vmem_cap = _vmem_capacity_bytes()
    budget = min(int(vmem_cap * 0.75), 96 << 20)   # headroom for compiler scratch

    tm, tk, tn = _select_tiles(M, K, N, budget, out_itemsize)

    # Pad M up to a tile multiple (never fall back to a fully-resident block).
    M_pad = _round_up(M, tm)
    if M_pad != M:
        x2 = jnp.pad(x2, ((0, M_pad - M), (0, 0)))

    # v7x megacore: keep >=2 steps on a "parallel" axis so both TCs get work.
    if M_pad // tm < 2 and N // tn < 2 and tn == N and N % 256 == 0:
        tn = N // 2

    nm, nn, nk = M_pad // tm, N // tn, K // tk
    grid = (nm, nn, nk)

    per_step = 4 * (tm * tk + tk * tn + tn) + out_itemsize * tm * tn
    vmem_limit = int(min(max(2 * per_step + 4 * tm * tn + (2 << 20), 16 << 20),
                         budget))

    x_bytes = 4 * M_pad * K * nn
    w_bytes = 4 * K * N * (nm if (nn > 1 or nk > 1) else 1)
    cost = pl.CostEstimate(
        flops=2 * M_pad * N * K,
        transcendentals=0,
        bytes_accessed=x_bytes + w_bytes + 4 * N + out_itemsize * M_pad * N,
    )

    out = pl.pallas_call(
        _fphead_kernel,
        out_shape=jax.ShapeDtypeStruct((M_pad, N), out_dtype),
        grid_spec=pltpu.PrefetchScalarGridSpec(
            num_scalar_prefetch=0,
            grid=grid,
            in_specs=[
                pl.BlockSpec((tm, tk), lambda i, j, k: (i, k)),   # x tile
                pl.BlockSpec((tk, tn), lambda i, j, k: (k, j)),   # weight [K,N]
                pl.BlockSpec((1, tn), lambda i, j, k: (0, j)),    # bias
            ],
            out_specs=pl.BlockSpec((tm, tn), lambda i, j, k: (i, j)),
            scratch_shapes=[pltpu.VMEM((tm, tn), jnp.float32)],
        ),
        compiler_params=pltpu.CompilerParams(
            dimension_semantics=("parallel", "parallel", "arbitrary"),
            vmem_limit_bytes=vmem_limit,
        ),
        cost_estimate=cost,
    )(x2, w_t, bias2)

    return out[:M].reshape(B, L, N)


# ---------------------------------------------------------------------------
# Self-test
# ---------------------------------------------------------------------------
if __name__ == "__main__":
    B, L, HID, OUT = 2, 8, 32, OUT_DIM

    key = jax.random.PRNGKey(0)
    kx, kw, kb = jax.random.split(key, 3)

    x = jax.random.normal(kx, (B, L, HID), dtype=jnp.float32)
    # nn.Linear-style init: uniform(-1/sqrt(K), 1/sqrt(K)), torch layout [N, K].
    bound = 1.0 / jnp.sqrt(jnp.float32(HID))
    weight = jax.random.uniform(kw, (OUT, HID), minval=-bound, maxval=bound,
                                dtype=jnp.float32)
    bias = jax.random.uniform(kb, (OUT,), minval=-bound, maxval=bound,
                              dtype=jnp.float32)

    w_t, b2 = prepare_fphead_params(weight, bias)   # one-time param prep
    out = fphead_forward(x, w_t, b2)
    out = jax.block_until_ready(out)

    ref = jnp.einsum("blk,nk->bln", x, weight) + bias
    assert out.shape == (B, L, OUT)
    assert jnp.allclose(out, ref, atol=1e-5, rtol=1e-5)

    print("KERNEL_OK")
</pallas_src>

<mosaic_0001>
module attributes {stable_mosaic.version = 11 : i64} {
  func.func @_fphead_kernel(%arg0: i32, %arg1: i32, %arg2: i32, %arg3: memref<16x32xf32, #tpu.memory_space<vmem>>, %arg4: memref<32x512xf32, #tpu.memory_space<vmem>>, %arg5: memref<1x512xf32, #tpu.memory_space<vmem>>, %arg6: memref<16x512xf32, #tpu.memory_space<vmem>>, %arg7: memref<16x512xf32, #tpu.memory_space<vmem>>) attributes {dimension_semantics = [#tpu.dimension_semantics<parallel>, #tpu.dimension_semantics<parallel>, #tpu.dimension_semantics<arbitrary>], iteration_bounds = array<i64: 1, 2, 1>, scalar_prefetch = 0 : i64, scratch_operands = 1 : i64, tpu.core_type = #tpu.core_type<tc>, window_params = [{transform_indices = @transform_0, window_bounds = array<i64: 16, 32>}, {transform_indices = @transform_1, window_bounds = array<i64: 32, 512>}, {transform_indices = @transform_2, window_bounds = array<i64: 1, 512>}, {transform_indices = @transform_3, window_bounds = array<i64: 16, 512>}]} {
    %c0_i32 = arith.constant 0 : i32
    %0 = arith.cmpi eq, %arg2, %c0_i32 : i32
    %1 = arith.extui %0 : i1 to i32
    %c0_i32_0 = arith.constant 0 : i32
    %2 = arith.cmpi ne, %1, %c0_i32_0 : i32
    scf.if %2 {
      %cst_10 = arith.constant 0.000000e+00 : f32
      %12 = vector.broadcast %cst_10 : f32 to vector<16x512xf32>
      %c0_11 = arith.constant 0 : index
      %c0_12 = arith.constant 0 : index
      %13 = vector.load %arg7[%c0_11, %c0_12] : memref<16x512xf32, #tpu.memory_space<vmem>>, vector<16x512xf32>
      tpu.vector_store %arg7[%c0_11, %c0_12], %12 {strides = array<i32>} : memref<16x512xf32, #tpu.memory_space<vmem>>, vector<16x512xf32>,
    } else {
    }
    %c0 = arith.constant 0 : index
    %c0_1 = arith.constant 0 : index
    %3 = vector.load %arg7[%c0, %c0_1] : memref<16x512xf32, #tpu.memory_space<vmem>>, vector<16x512xf32>
    %c0_2 = arith.constant 0 : index
    %c0_3 = arith.constant 0 : index
    %4 = vector.load %arg3[%c0_2, %c0_3] : memref<16x32xf32, #tpu.memory_space<vmem>>, vector<16x32xf32>
    %c0_4 = arith.constant 0 : index
    %c0_5 = arith.constant 0 : index
    %5 = vector.load %arg4[%c0_4, %c0_5] : memref<32x512xf32, #tpu.memory_space<vmem>>, vector<32x512xf32>
    %cst = arith.constant dense<0.000000e+00> : vector<16x512xf32>
    %6 = tpu.matmul %4, %5, %cst {dimension_numbers = #tpu.dot_dimension_numbers<[1], [0], [0], [1], [0, 0, 1, 1], [], []>} : vector<16x32xf32>, vector<32x512xf32>, vector<16x512xf32> -> vector<16x512xf32>
    %7 = arith.addf %3, %6 : vector<16x512xf32>
    %c0_6 = arith.constant 0 : index
    %c0_7 = arith.constant 0 : index
    %8 = vector.load %arg7[%c0_6, %c0_7] : memref<16x512xf32, #tpu.memory_space<vmem>>, vector<16x512xf32>
    tpu.vector_store %arg7[%c0_6, %c0_7], %7 {strides = array<i32>} : memref<16x512xf32, #tpu.memory_space<vmem>>, vector<16x512xf32>,
    %c0_i32_8 = arith.constant 0 : i32
    %9 = arith.cmpi eq, %arg2, %c0_i32_8 : i32
    %10 = arith.extui %9 : i1 to i32
    %c0_i32_9 = arith.constant 0 : i32
    %11 = arith.cmpi ne, %10, %c0_i32_9 : i32
    scf.if %11 {
      %c0_10 = arith.constant 0 : index
      %c0_11 = arith.constant 0 : index
      %12 = vector.load %arg7[%c0_10, %c0_11] : memref<16x512xf32, #tpu.memory_space<vmem>>, vector<16x512xf32>
      %c0_12 = arith.constant 0 : index
      %c0_13 = arith.constant 0 : index
      %13 = vector.load %arg5[%c0_12, %c0_13] : memref<1x512xf32, #tpu.memory_space<vmem>>, vector<1x512xf32>
      %14 = vector.broadcast %13 : vector<1x512xf32> to vector<16x512xf32>
      %15 = arith.addf %12, %14 : vector<16x512xf32>
      %c0_14 = arith.constant 0 : index
      %c0_15 = arith.constant 0 : index
      %16 = vector.load %arg6[%c0_14, %c0_15] : memref<16x512xf32, #tpu.memory_space<vmem>>, vector<16x512xf32>
      tpu.vector_store %arg6[%c0_14, %c0_15], %15 {strides = array<i32>} : memref<16x512xf32, #tpu.memory_space<vmem>>, vector<16x512xf32>,
    } else {
    }
    return
  }
  func.func @transform_0(%arg0: i32, %arg1: i32, %arg2: i32) -> (i32, i32) {
    %c0_i32 = arith.constant 0 : i32
    return %arg0, %arg2 : i32, i32
  }
  func.func @transform_1(%arg0: i32, %arg1: i32, %arg2: i32) -> (i32, i32) {
    %c0_i32 = arith.constant 0 : i32
    return %arg2, %arg1 : i32, i32
  }
  func.func @transform_2(%arg0: i32, %arg1: i32, %arg2: i32) -> (i32, i32) {
    %c0_i32 = arith.constant 0 : i32
    %c0_i32_0 = arith.constant 0 : i32
    return %c0_i32, %arg1 : i32, i32
  }
  func.func @transform_3(%arg0: i32, %arg1: i32, %arg2: i32) -> (i32, i32) {
    %c0_i32 = arith.constant 0 : i32
    return %arg0, %arg1 : i32, i32
  }
}

</mosaic_0001>

<llo_original>
// kernel: tpu_custom_call.1
$region0: #{tpu_custom_call.1}
  #allocation0 [shape = 'u32[]', space=smem, size = 0x4, offset = 0x4, fixed_abs, tag = 'smem constant byte address 0x4 - core index']
  #allocation1 [shape = 'u32[144,128]{1,0:T(1,128)}', space=vmem, size = 0x12000, scoped, tag = 'internal scratch']
  #allocation2 [shape = 'f32[16,512]{1,0:T(8,128)}', space=vmem, size = 0x8000, scoped, tag = 'scratch operand']
  %s0 = inlined_call_operand.hbm [shape: f32[16,32], index: 0, kind: input, shape index: {}]
  %s1 = inlined_call_operand.hbm [shape: f32[32,1024], index: 1, kind: input, shape index: {}]
  %s2 = inlined_call_operand.hbm [shape: f32[1,1024], index: 2, kind: input, shape index: {}]
  %s3 = inlined_call_operand.hbm [shape: f32[16,1024], index: 3, kind: output, shape index: {}]
  %s4 = sld [smem:[#allocation0]]
  $region65: #{tpu_custom_call.1} parent=0
    _
  %s6 = ssub.s32 1, %s4
  %s7 = scalar_select 0, %s6, %s4
  $region1: #{tpu_custom_call.1} parent=0
    #allocation3 [shape = 'u8[8192]{0}', space=vmem, size = 0x2000, scoped, tag = 'input window, operand 0, single buffered']
    #allocation4 [shape = 's32[2]{0}', space=sflag, size = 0x8, scoped, tag = 'scoped memory for tpu_custom_call.1']
    #allocation5 [shape = 's32[2]{0}', space=sflag, size = 0x8, scoped, tag = 'scoped memory for tpu_custom_call.1']
    #allocation6 [shape = 'u8[131072]{0}', space=vmem, size = 0x20000, scoped, tag = 'input window, operand 1']
    #allocation7 [shape = 's32[2]{0}', space=sflag, size = 0x8, scoped, tag = 'scoped memory for tpu_custom_call.1']
    #allocation8 [shape = 'u8[4096]{0}', space=vmem, size = 0x1000, scoped, tag = 'input window, operand 2']
    #allocation9 [shape = 'u8[65536]{0}', space=vmem, size = 0x10000, scoped, tag = 'output window, operand 0']
    %8 = vsyncpa [#allocation4], 0
    %9 = vsyncpa [#allocation7], 0
    %s10 = scalar_lea.sflag [#allocation7], 1
    %11 = vsyncpa %s10, 0
    %12 = vsyncpa [#allocation5], 0
    %s13 = scalar_lea.sflag [#allocation5], 1
    %14 = vsyncpa %s13, 0
    loop: start=0, step=1, limit=4
    $region2: #{tpu_custom_call.1} parent=1 // loop_pre_header
      _
    $region3: #{tpu_custom_call.1} parent=1 // loop_header
      %s16 = sphi 0, %s20
      %p17 = scmp.ge.s32.totalorder %s16, 4
      %s23 = sphi 0, %s42
      %s24 = sphi 0, %s38
      %s25 = sphi 0, %s34
      %s26 = sphi 0, %s23
      %s27 = sphi 0, %s24
      %s28 = sphi 0, %s25
      %s29 = sphi 0, %s26
      %s30 = sphi 0, %s27
      %s31 = sphi 0, %s28
      %s47 = sphi 0, %s49
      %s50 = sphi 0, %s47
      %s51 = sphi 0, %s50
      %s67 = sphi 0, %s51
      %s75 = sphi 0, %s77
      %s78 = sphi 0, %s75
      %s79 = sphi 0, %s78
      %s95 = sphi 0, %s79
      %s101 = sphi 0, %s103
      %s104 = sphi 0, %s101
      %s105 = sphi 0, %s104
      %s121 = sphi 0, %s105
      %s129 = sphi 0, %s131
      %s132 = sphi 0, %s129
      %s133 = sphi 0, %s132
      %s149 = sphi 0, %s133
    $region4: #{tpu_custom_call.1} parent=1 // loop_header_branch
      %19 = sbr.rel (%p17) target = $region8
    $region5: #{tpu_custom_call.1} parent=1 // loop_body
      %s21 = ssub.s32 %s16, 1
      %s22 = ssub.s32 %s16, 2
      %s32 = sadd.s32 1, %s25
      %p33 = scmp.ge.s32.totalorder %s32, 1
      %s34 = scalar_select %p33, 0, %s32
      %s35 = sadd.s32 1, %s24
      %s36 = scalar_select %p33, %s35, %s24
      %p37 = scmp.ge.s32.totalorder %s36, 2
      %s38 = scalar_select %p37, 0, %s36
      %s39 = sadd.s32 1, %s23
      %s40 = scalar_select %p37, %s39, %s23
      %p41 = scmp.ge.s32.totalorder %s40, 1
      %s42 = scalar_select %p41, 0, %s40
      %s43 = ssub.s32 %s23, %s42
      %s44 = ssub.s32 %s25, %s34
      %s45 = sor.u32 %s43, %s44
      %p46 = scmp.eq.s32.totalorder %s45, 0
      %s48 = sadd.s32 %s47, 1
      %s49 = scalar_select %p46, %s47, %s48
      %p52 = pneg %p46
      %p53 = scmp.eq.s32.totalorder %s16, 1
      %p54 = por %p52, %p53
      %p55 = scmp.ne.s32.totalorder %s47, %s50
      %p56 = scmp.eq.s32.totalorder %s16, 0
      %p57 = por %p55, %p56
      %p58 = scmp.ne.s32.totalorder %s47, %s50
      %p59 = scmp.eq.s32.totalorder %s21, 1
      %p60 = por %p58, %p59
      %p61 = scmp.ne.s32.totalorder %s50, %s51
      %p62 = scmp.eq.s32.totalorder %s21, 0
      %p63 = por %p61, %p62
      %p64 = scmp.ne.s32.totalorder %s50, %s51
      %p65 = scmp.eq.s32.totalorder %s22, 1
      %p66 = por %p64, %p65
      %p68 = scmp.ne.s32.totalorder %s51, %s67
      %p69 = scmp.eq.s32.totalorder %s22, 0
      %p70 = por %p68, %p69
      %s71 = ssub.s32 %s25, %s34
      %s72 = ssub.s32 %s24, %s38
      %s73 = sor.u32 %s71, %s72
      %p74 = scmp.eq.s32.totalorder %s73, 0
      %s76 = sadd.s32 %s75, 1
      %s77 = scalar_select %p74, %s75, %s76
      %p80 = pneg %p74
      %p81 = scmp.eq.s32.totalorder %s16, 1
      %p82 = por %p80, %p81
      %p83 = scmp.ne.s32.totalorder %s75, %s78
      %p84 = scmp.eq.s32.totalorder %s16, 0
      %p85 = por %p83, %p84
      %p86 = scmp.ne.s32.totalorder %s75, %s78
      %p87 = scmp.eq.s32.totalorder %s21, 1
      %p88 = por %p86, %p87
      %p89 = scmp.ne.s32.totalorder %s78, %s79
      %p90 = scmp.eq.s32.totalorder %s21, 0
      %p91 = por %p89, %p90
      %p92 = scmp.ne.s32.totalorder %s78, %s79
      %p93 = scmp.eq.s32.totalorder %s22, 1
      %p94 = por %p92, %p93
      %p96 = scmp.ne.s32.totalorder %s79, %s95
      %p97 = scmp.eq.s32.totalorder %s22, 0
      %p98 = por %p96, %p97
      %s99 = ssub.s32 %s24, %s38
      %p100 = scmp.eq.s32.totalorder %s99, 0
      %s102 = sadd.s32 %s101, 1
      %s103 = scalar_select %p100, %s101, %s102
      %p106 = pneg %p100
      %p107 = scmp.eq.s32.totalorder %s16, 1
      %p108 = por %p106, %p107
      %p109 = scmp.ne.s32.totalorder %s101, %s104
      %p110 = scmp.eq.s32.totalorder %s16, 0
      %p111 = por %p109, %p110
      %p112 = scmp.ne.s32.totalorder %s101, %s104
      %p113 = scmp.eq.s32.totalorder %s21, 1
      %p114 = por %p112, %p113
      %p115 = scmp.ne.s32.totalorder %s104, %s105
      %p116 = scmp.eq.s32.totalorder %s21, 0
      %p117 = por %p115, %p116
      %p118 = scmp.ne.s32.totalorder %s104, %s105
      %p119 = scmp.eq.s32.totalorder %s22, 1
      %p120 = por %p118, %p119
      %p122 = scmp.ne.s32.totalorder %s105, %s121
      %p123 = scmp.eq.s32.totalorder %s22, 0
      %p124 = por %p122, %p123
      %s125 = ssub.s32 %s23, %s42
      %s126 = ssub.s32 %s24, %s38
      %s127 = sor.u32 %s125, %s126
      %p128 = scmp.eq.s32.totalorder %s127, 0
      %s130 = sadd.s32 %s129, 1
      %s131 = scalar_select %p128, %s129, %s130
      %p134 = pneg %p128
      %p135 = scmp.eq.s32.totalorder %s16, 1
      %p136 = por %p134, %p135
      %p137 = scmp.ne.s32.totalorder %s129, %s132
      %p138 = scmp.eq.s32.totalorder %s16, 0
      %p139 = por %p137, %p138
      %p140 = scmp.ne.s32.totalorder %s129, %s132
      %p141 = scmp.eq.s32.totalorder %s21, 1
      %p142 = por %p140, %p141
      %p143 = scmp.ne.s32.totalorder %s132, %s133
      %p144 = scmp.eq.s32.totalorder %s21, 0
      %p145 = por %p143, %p144
      %p146 = scmp.ne.s32.totalorder %s132, %s133
      %p147 = scmp.eq.s32.totalorder %s22, 1
      %p148 = por %p146, %p147
      %p150 = scmp.ne.s32.totalorder %s133, %s149
      %p151 = scmp.eq.s32.totalorder %s22, 0
      %p152 = por %p150, %p151
      %p153 = scmp.le.s32.totalorder 1, %s16
      %p154 = scmp.lt.s32.totalorder %s16, 3
      %p155 = pnand %p153, %p154
      %p156 = pneg %p155
      // Predicated region
      $region9: #{tpu_custom_call.1} parent=5 // pred_check
        _
      $region10: #{tpu_custom_call.1} parent=5 // pred_check_branch
        %158 = sbr.rel (%p155) target = $region12
      $region11: #{tpu_custom_call.1} parent=5 // pred_region
        %s159 = ssub.s32 %s16, 1
        // Predicated region
        $region13: #{tpu_custom_call.1} parent=11 // pred_check
          %p160 = pneg %p63
        $region14: #{tpu_custom_call.1} parent=11 // pred_check_branch
          %162 = sbr.rel (%p160) target = $region16
        $region15: #{tpu_custom_call.1} parent=11 // pred_region
          %s163 = smul.u32 2, %s26
          %s165 = ssub.s32 256, 256
          %166 = vsyncadd [#allocation4], %s165
          %s167 = sadd.s32 %s28, %s163
          %s168 = smul.addr %s167, 128
          %s169 = scalar_lea.hbm %s0, %s168
          %s170 = sshll.u32 [#allocation3], 4
          %s171 = int_to_ptr.vmem [resolvable:$true] %s170
          %176 = dma.hbm_to_vmem [thread:$0]  %s169, 256, %s171, [#allocation4], 128, 128, 8
        $region16: #{tpu_custom_call.1} parent=11 // pred_fallthru
          _
      $region12: #{tpu_custom_call.1} parent=5 // pred_fallthru
        _
      %p177 = scmp.lt.s32.totalorder %s16, 2
      // Predicated region
      $region17: #{tpu_custom_call.1} parent=5 // pred_check
        %p178 = pneg %p177
      $region18: #{tpu_custom_call.1} parent=5 // pred_check_branch
        %180 = sbr.rel (%p178) target = $region20
      $region19: #{tpu_custom_call.1} parent=5 // pred_region
        // Predicated region
        $region21: #{tpu_custom_call.1} parent=19 // pred_check
          %p181 = pneg %p85
        $region22: #{tpu_custom_call.1} parent=19 // pred_check_branch
          %183 = sbr.rel (%p181) target = $region24
        $region23: #{tpu_custom_call.1} parent=19 // pred_region
          %s184 = sand.u32 %s16, 1
          %s185 = scalar_lea.sflag [#allocation7], %s184
          %s186 = sand.u32 %s75, 1
          %s187 = smul.addr %s186, 128
          %s188 = scalar_lea.vmem [#allocation6], %s187
          %s189 = smul.u32 4, %s25
          %s190 = smul.u32 4, %s24
          %s192 = ssub.s32 2048, 2048
          %193 = vsyncadd %s185, %s192
          %s194 = smul.addr %s189, 8
          %s195 = sadd.s32 %s190, %s194
          %s196 = smul.addr %s195, 128
          %s197 = scalar_lea.hbm %s1, %s196
          %s198 = sshll.u32 %s188, 4
          %s199 = int_to_ptr.vmem [resolvable:$true] %s198
          %204 = dma.hbm_to_vmem [thread:$0]  %s197, 2048, %s199, %s185, 1024, 512, 32
        $region24: #{tpu_custom_call.1} parent=19 // pred_fallthru
          _
        // Predicated region
        $region25: #{tpu_custom_call.1} parent=19 // pred_check
          %p205 = pneg %p111
        $region26: #{tpu_custom_call.1} parent=19 // pred_check_branch
          %207 = sbr.rel (%p205) target = $region28
        $region27: #{tpu_custom_call.1} parent=19 // pred_region
          %s208 = sand.u32 %s16, 1
          %s209 = scalar_lea.sflag [#allocation7], %s208
          %s210 = sand.u32 %s101, 1
          %s211 = smul.addr %s210, 4
          %s212 = scalar_lea.vmem [#allocation8], %s211
          %s213 = smul.u32 4, %s24
          %s215 = ssub.s32 64, 64
          %216 = vsyncadd %s209, %s215
          %s217 = smul.addr %s213, 16
          %s218 = scalar_lea.hbm %s2, %s217
          %s220 = sshll.u32 %s212, 4
          %s221 = int_to_ptr.vmem [resolvable:$true] %s220
          %223 = dma.hbm_to_vmem [thread:$0]  %s218, 64, %s221, %s209
        $region28: #{tpu_custom_call.1} parent=19 // pred_fallthru
          _
      $region20: #{tpu_custom_call.1} parent=5 // pred_fallthru
        _
      %p224 = scmp.le.s32.totalorder 1, %s16
      %p225 = scmp.lt.s32.totalorder %s16, 3
      %p226 = pnand %p224, %p225
      %p227 = pneg %p226
      // Predicated region
      $region29: #{tpu_custom_call.1} parent=5 // pred_check
        _
      $region30: #{tpu_custom_call.1} parent=5 // pred_check_branch
        %229 = sbr.rel (%p226) target = $region32
      $region31: #{tpu_custom_call.1} parent=5 // pred_region
        %s230 = ssub.s32 %s16, 1
        // Predicated region
        $region33: #{tpu_custom_call.1} parent=31 // pred_check
          %p231 = pneg %p63
        $region34: #{tpu_custom_call.1} parent=31 // pred_check_branch
          %233 = sbr.rel (%p231) target = $region36
        $region35: #{tpu_custom_call.1} parent=31 // pred_region
          %234 = dma.done [#allocation4], 256
        $region36: #{tpu_custom_call.1} parent=31 // pred_fallthru
          _
        %s235 = sand.u32 %s21, 1
        %s236 = scalar_lea.sflag [#allocation7], %s235
        %s237 = sand.u32 %s78, 1
        %s238 = smul.addr %s237, 128
        %s239 = scalar_lea.vmem [#allocation6], %s238
        // Predicated region
        $region37: #{tpu_custom_call.1} parent=31 // pred_check
          %p240 = pneg %p91
        $region38: #{tpu_custom_call.1} parent=31 // pred_check_branch
          %242 = sbr.rel (%p240) target = $region40
        $region39: #{tpu_custom_call.1} parent=31 // pred_region
          %243 = dma.done %s236, 2048
        $region40: #{tpu_custom_call.1} parent=31 // pred_fallthru
          _
        %s244 = sand.u32 %s21, 1
        %s245 = scalar_lea.sflag [#allocation7], %s244
        %s246 = sand.u32 %s104, 1
        %s247 = smul.addr %s246, 4
        %s248 = scalar_lea.vmem [#allocation8], %s247
        // Predicated region
        $region41: #{tpu_custom_call.1} parent=31 // pred_check
          %p249 = pneg %p117
        $region42: #{tpu_custom_call.1} parent=31 // pred_check_branch
          %251 = sbr.rel (%p249) target = $region44
        $region43: #{tpu_custom_call.1} parent=31 // pred_region
          %252 = dma.done %s245, 64
        $region44: #{tpu_custom_call.1} parent=31 // pred_fallthru
          _
        %p253 = pneg %p63
        %p254 = pneg %p60
        %s255 = sand.u32 %s21, 1
        %s256 = scalar_lea.sflag [#allocation7], %s255
        %s257 = sand.u32 %s78, 1
        %s258 = smul.addr %s257, 128
        %s259 = scalar_lea.vmem [#allocation6], %s258
        %p260 = pneg %p91
        %p261 = pneg %p88
        %s262 = sand.u32 %s21, 1
        %s263 = scalar_lea.sflag [#allocation7], %s262
        %s264 = sand.u32 %s104, 1
        %s265 = smul.addr %s264, 4
        %s266 = scalar_lea.vmem [#allocation8], %s265
        %p267 = pneg %p117
        %p268 = pneg %p114
        %p269 = pneg %p145
        %p270 = pneg %p142
        %s271 = sand.u32 %s132, 1
        %s272 = scalar_lea.sflag [#allocation5], %s271
        %s273 = sand.u32 %s132, 1
        %s274 = smul.addr %s273, 64
        %s275 = scalar_lea.vmem [#allocation9], %s274
        %s276 = smul.u32 2, %s26
        %s277 = smul.u32 4, %s28
        %s278 = smul.u32 4, %s27
        %s279 = smul.u32 4, %s27
        %s280 = smul.u32 2, %s26
        %s281 = smul.u32 4, %s27
        %p282 = scmp.eq.s32.totalorder %s28, 0
        // Predicated region
        $region45: #{tpu_custom_call.1} parent=31 // pred_check
          %p283 = pneg %p282
        $region46: #{tpu_custom_call.1} parent=31 // pred_check_branch
          %285 = sbr.rel (%p283) target = $region48
        $region47: #{tpu_custom_call.1} parent=31 // pred_region
          %286 = vst [vmem:[#allocation2] sm:$0xff] 0.0
          %287 = vst [vmem:[#allocation2 + $0x8] sm:$0xff] 0.0
          %288 = vst [vmem:[#allocation2 + $0x10] sm:$0xff] 0.0
          %289 = vst [vmem:[#allocation2 + $0x18] sm:$0xff] 0.0
          %290 = vst [vmem:[#allocation2 + $0x20] sm:$0xff] 0.0
          %291 = vst [vmem:[#allocation2 + $0x28] sm:$0xff] 0.0
          %292 = vst [vmem:[#allocation2 + $0x30] sm:$0xff] 0.0
          %293 = vst [vmem:[#allocation2 + $0x38] sm:$0xff] 0.0
        $region48: #{tpu_custom_call.1} parent=31 // pred_fallthru
          _
        %v294 = vld [vmem:[#allocation2] sm:$0xff]
        %v295 = vld [vmem:[#allocation2 + $0x8] sm:$0xff]
        %v296 = vld [vmem:[#allocation2 + $0x10] sm:$0xff]
        %v297 = vld [vmem:[#allocation2 + $0x18] sm:$0xff]
        %v298 = vld [vmem:[#allocation2 + $0x20] sm:$0xff]
        %v299 = vld [vmem:[#allocation2 + $0x28] sm:$0xff]
        %v300 = vld [vmem:[#allocation2 + $0x30] sm:$0xff]
        %v301 = vld [vmem:[#allocation2 + $0x38] sm:$0xff]
        %v302 = vld [vmem:[#allocation3] sm:$0xff]
        %v303 = vld [vmem:[#allocation3 + $0x8] sm:$0xff]
        %v304 = vld [vmem:[%s239] sm:$0xff]
        %v305 = vld [vmem:[%s239 + $0x8] sm:$0xff]
        %v306 = vld [vmem:[%s239 + $0x10] sm:$0xff]
        %v307 = vld [vmem:[%s239 + $0x18] sm:$0xff]
        %v308 = vld [vmem:[%s239 + $0x20] sm:$0xff]
        %v309 = vld [vmem:[%s239 + $0x28] sm:$0xff]
        %v310 = vld [vmem:[%s239 + $0x30] sm:$0xff]
        %v311 = vld [vmem:[%s239 + $0x38] sm:$0xff]
        %v312 = vld [vmem:[%s239 + $0x40] sm:$0xff]
        %v313 = vld [vmem:[%s239 + $0x48] sm:$0xff]
        %v314 = vld [vmem:[%s239 + $0x50] sm:$0xff]
        %v315 = vld [vmem:[%s239 + $0x58] sm:$0xff]
        %v316 = vld [vmem:[%s239 + $0x60] sm:$0xff]
        %v317 = vld [vmem:[%s239 + $0x68] sm:$0xff]
        %v318 = vld [vmem:[%s239 + $0x70] sm:$0xff]
        %v319 = vld [vmem:[%s239 + $0x78] sm:$0xff]
        %vm320 = vcmask 261120
        %v322 = vsel %vm320, %v302, 0
        %v325 = vsel %vm320, %v303, 0
        %327 = vmatprep.subr.mxu0 %v305
        %328 = vmatpush1.msra.mxu0 %v304
        %329 = vmatprep.subr.mxu0 %v309
        %330 = vmatpush1.msra.mxu0 %v308
        %331 = vmatprep.subr.mxu0 %v313
        %332 = vmatpush1.msra.mxu0 %v312
        %333 = vmatprep.subr.mxu0 %v317
        %334 = vmatpush1.msra.mxu0 %v316
        %335 = vmatprep.subr.mxu0 0.0
        %336 = vmatpush1.msra.mxu0 0.0
        %337 = vmatprep.subr.mxu0 0.0
        %338 = vmatpush1.msra.mxu0 0.0
        %339 = vmatprep.subr.mxu0 0.0
        %340 = vmatpush1.msra.mxu0 0.0
        %341 = vmatprep.subr.mxu0 0.0
        %342 = vmatpush1.msra.mxu0 0.0
        %343 = vmatprep.subr.mxu0 0.0
        %344 = vmatpush1.msra.mxu0 0.0
        %345 = vmatprep.subr.mxu0 0.0
        %346 = vmatpush1.msra.mxu0 0.0
        %347 = vmatprep.subr.mxu0 0.0
        %348 = vmatpush1.msra.mxu0 0.0
        %349 = vmatprep.subr.mxu0 0.0
        %350 = vmatpush1.msra.mxu0 0.0
        %351 = vmatprep.subr.mxu0 0.0
        %352 = vmatpush1.msra.mxu0 0.0
        %353 = vmatprep.subr.mxu0 0.0
        %354 = vmatpush1.msra.mxu0 0.0
        %355 = vmatprep.subr.mxu0 0.0
        %356 = vmatpush1.msra.mxu0 0.0
        %357 = vmatprep.subr.mxu0 0.0
        %358 = vmatpush1.msra.mxu0 0.0
        %359 = vmatprep.subr.mxu0 0.0
        %360 = vmatpush1.msra.mxu0 0.0
        %361 = vmatprep.subr.mxu0 0.0
        %362 = vmatpush1.msra.mxu0 0.0
        %363 = vmatprep.subr.mxu0 0.0
        %364 = vmatpush1.msra.mxu0 0.0
        %365 = vmatprep.subr.mxu0 0.0
        %366 = vmatpush1.msra.mxu0 0.0
        %367 = vmatprep.subr.mxu0 0.0
        %368 = vmatpush1.msra.mxu0 0.0
        %369 = vmatprep.subr.mxu0 0.0
        %370 = vmatpush1.msra.mxu0 0.0
        %371 = vmatprep.subr.mxu0 0.0
        %372 = vmatpush1.msra.mxu0 0.0
        %373 = vmatprep.subr.mxu0 0.0
        %374 = vmatpush1.msra.mxu0 0.0
        %375 = vmatprep.subr.mxu0 0.0
        %376 = vmatpush1.msra.mxu0 0.0
        %377 = vmatprep.subr.mxu0 0.0
        %378 = vmatpush1.msra.mxu0 0.0
        %379 = vmatprep.subr.mxu0 0.0
        %380 = vmatpush1.msra.mxu0 0.0
        %381 = vmatprep.subr.mxu0 0.0
        %382 = vmatpush1.msra.mxu0 0.0
        %383 = vmatprep.subr.mxu0 0.0
        %384 = vmatpush1.msra.mxu0 0.0
        %385 = vmatprep.subr.mxu0 0.0
        %386 = vmatpush1.msra.mxu0 0.0
        %387 = vmatprep.subr.mxu0 0.0
        %388 = vmatpush1.msra.mxu0 0.0
        %389 = vmatprep.subr.mxu0 0.0
        %390 = vmatpush1.msra.mxu0 0.0
        %391 = vmatprep.mubr.f32.mxu0 0.0
        %392 = vmatmul.mubr.f32.gmra.mrb[0].mxu0 %v322
        %v393 = vpop.f32.mrb[0].mxu0
        %v394 = vadd.f32 0.0, %v393
        %v395 = vpop.f32.mrb[0].mxu0
        %v396 = vadd.f32 0.0, %v395
        %397 = vmatprep.mubr.f32.mxu0 0.0
        %398 = vmatmul.mubr.f32.gmra.mrb[0].mxu0 %v325
        %v399 = vpop.f32.mrb[0].mxu0
        %v400 = vadd.f32 0.0, %v399
        %v401 = vpop.f32.mrb[0].mxu0
        %v402 = vadd.f32 0.0, %v401
        %403 = vdwg.mxu0
        %404 = vmatprep.subr.mxu0 %v307
        %405 = vmatpush1.msra.mxu0 %v306
        %406 = vmatprep.subr.mxu0 %v311
        %407 = vmatpush1.msra.mxu0 %v310
        %408 = vmatprep.subr.mxu0 %v315
        %409 = vmatpush1.msra.mxu0 %v314
        %410 = vmatprep.subr.mxu0 %v319
        %411 = vmatpush1.msra.mxu0 %v318
        %412 = vmatprep.subr.mxu0 0.0
        %413 = vmatpush1.msra.mxu0 0.0
        %414 = vmatprep.subr.mxu0 0.0
        %415 = vmatpush1.msra.mxu0 0.0
        %416 = vmatprep.subr.mxu0 0.0
        %417 = vmatpush1.msra.mxu0 0.0
        %418 = vmatprep.subr.mxu0 0.0
        %419 = vmatpush1.msra.mxu0 0.0
        %420 = vmatprep.subr.mxu0 0.0
        %421 = vmatpush1.msra.mxu0 0.0
        %422 = vmatprep.subr.mxu0 0.0
        %423 = vmatpush1.msra.mxu0 0.0
        %424 = vmatprep.subr.mxu0 0.0
        %425 = vmatpush1.msra.mxu0 0.0
        %426 = vmatprep.subr.mxu0 0.0
        %427 = vmatpush1.msra.mxu0 0.0
        %428 = vmatprep.subr.mxu0 0.0
        %429 = vmatpush1.msra.mxu0 0.0
        %430 = vmatprep.subr.mxu0 0.0
        %431 = vmatpush1.msra.mxu0 0.0
        %432 = vmatprep.subr.mxu0 0.0
        %433 = vmatpush1.msra.mxu0 0.0
        %434 = vmatprep.subr.mxu0 0.0
        %435 = vmatpush1.msra.mxu0 0.0
        %436 = vmatprep.subr.mxu0 0.0
        %437 = vmatpush1.msra.mxu0 0.0
        %438 = vmatprep.subr.mxu0 0.0
        %439 = vmatpush1.msra.mxu0 0.0
        %440 = vmatprep.subr.mxu0 0.0
        %441 = vmatpush1.msra.mxu0 0.0
        %442 = vmatprep.subr.mxu0 0.0
        %443 = vmatpush1.msra.mxu0 0.0
        %444 = vmatprep.subr.mxu0 0.0
        %445 = vmatpush1.msra.mxu0 0.0
        %446 = vmatprep.subr.mxu0 0.0
        %447 = vmatpush1.msra.mxu0 0.0
        %448 = vmatprep.subr.mxu0 0.0
        %449 = vmatpush1.msra.mxu0 0.0
        %450 = vmatprep.subr.mxu0 0.0
        %451 = vmatpush1.msra.mxu0 0.0
        %452 = vmatprep.subr.mxu0 0.0
        %453 = vmatpush1.msra.mxu0 0.0
        %454 = vmatprep.subr.mxu0 0.0
        %455 = vmatpush1.msra.mxu0 0.0
        %456 = vmatprep.subr.mxu0 0.0
        %457 = vmatpush1.msra.mxu0 0.0
        %458 = vmatprep.subr.mxu0 0.0
        %459 = vmatpush1.msra.mxu0 0.0
        %460 = vmatprep.subr.mxu0 0.0
        %461 = vmatpush1.msra.mxu0 0.0
        %462 = vmatprep.subr.mxu0 0.0
        %463 = vmatpush1.msra.mxu0 0.0
        %464 = vmatprep.subr.mxu0 0.0
        %465 = vmatpush1.msra.mxu0 0.0
        %466 = vmatprep.subr.mxu0 0.0
        %467 = vmatpush1.msra.mxu0 0.0
        %468 = vmatprep.mubr.f32.mxu0 0.0
        %469 = vmatmul.mubr.f32.gmra.mrb[0].mxu0 %v322
        %v470 = vpop.f32.mrb[0].mxu0
        %v471 = vadd.f32 0.0, %v470
        %v472 = vpop.f32.mrb[0].mxu0
        %v473 = vadd.f32 0.0, %v472
        %474 = vmatprep.mubr.f32.mxu0 0.0
        %475 = vmatmul.mubr.f32.gmra.mrb[0].mxu0 %v325
        %v476 = vpop.f32.mrb[0].mxu0
        %v477 = vadd.f32 0.0, %v476
        %v478 = vpop.f32.mrb[0].mxu0
        %v479 = vadd.f32 0.0, %v478
        %480 = vdwg.mxu0
        %v481 = vadd.f32 %v294, %v394
        %v482 = vadd.f32 %v295, %v396
        %v483 = vadd.f32 %v296, %v471
        %v484 = vadd.f32 %v297, %v473
        %v485 = vadd.f32 %v298, %v400
        %v486 = vadd.f32 %v299, %v402
        %v487 = vadd.f32 %v300, %v477
        %v488 = vadd.f32 %v301, %v479
        %489 = vst [vmem:[#allocation2] sm:$0xff] %v481
        %490 = vst [vmem:[#allocation2 + $0x8] sm:$0xff] %v482
        %491 = vst [vmem:[#allocation2 + $0x10] sm:$0xff] %v483
        %492 = vst [vmem:[#allocation2 + $0x18] sm:$0xff] %v484
        %493 = vst [vmem:[#allocation2 + $0x20] sm:$0xff] %v485
        %494 = vst [vmem:[#allocation2 + $0x28] sm:$0xff] %v486
        %495 = vst [vmem:[#allocation2 + $0x30] sm:$0xff] %v487
        %496 = vst [vmem:[#allocation2 + $0x38] sm:$0xff] %v488
        // Predicated region
        $region49: #{tpu_custom_call.1} parent=31 // pred_check
          %p497 = pneg %p282
        $region50: #{tpu_custom_call.1} parent=31 // pred_check_branch
          %499 = sbr.rel (%p497) target = $region52
        $region51: #{tpu_custom_call.1} parent=31 // pred_region
          %v500 = vld [vmem:[#allocation2] sm:$0xff]
          %v501 = vld [vmem:[#allocation2 + $0x8] sm:$0xff]
          %v502 = vld [vmem:[#allocation2 + $0x10] sm:$0xff]
          %v503 = vld [vmem:[#allocation2 + $0x18] sm:$0xff]
          %v504 = vld [vmem:[#allocation2 + $0x20] sm:$0xff]
          %v505 = vld [vmem:[#allocation2 + $0x28] sm:$0xff]
          %v506 = vld [vmem:[#allocation2 + $0x30] sm:$0xff]
          %v507 = vld [vmem:[#allocation2 + $0x38] sm:$0xff]
          %v508 = vld [vmem:[%s248] sm:$0xf]
          %v510 = vlaneseq
          %v511 = vshrl.u32 %v510, 7
          %v512 = vsub.s32 0, %v511
          %v513 = vrot.slane %v508, %v512
          %v514 = vlaneseq
          %v515 = vshrl.u32 %v514, 7
          %v516 = vsub.s32 1, %v515
          %v517 = vrot.slane %v508, %v516
          %v518 = vlaneseq
          %v519 = vshrl.u32 %v518, 7
          %v520 = vsub.s32 2, %v519
          %v521 = vrot.slane %v508, %v520
          %v522 = vlaneseq
          %v523 = vshrl.u32 %v522, 7
          %v524 = vsub.s32 3, %v523
          %v525 = vrot.slane %v508, %v524
          %v530 = vadd.f32 %v500, %v513
          %v531 = vadd.f32 %v501, %v517
          %v532 = vadd.f32 %v502, %v521
          %v533 = vadd.f32 %v503, %v525
          %v534 = vadd.f32 %v504, %v513
          %v535 = vadd.f32 %v505, %v517
          %v536 = vadd.f32 %v506, %v521
          %v537 = vadd.f32 %v507, %v525
          %538 = vst [vmem:[%s275] sm:$0xff] %v530
          %539 = vst [vmem:[%s275 + $0x8] sm:$0xff] %v531
          %540 = vst [vmem:[%s275 + $0x10] sm:$0xff] %v532
          %541 = vst [vmem:[%s275 + $0x18] sm:$0xff] %v533
          %542 = vst [vmem:[%s275 + $0x20] sm:$0xff] %v534
          %543 = vst [vmem:[%s275 + $0x28] sm:$0xff] %v535
          %544 = vst [vmem:[%s275 + $0x30] sm:$0xff] %v536
          %545 = vst [vmem:[%s275 + $0x38] sm:$0xff] %v537
        $region52: #{tpu_custom_call.1} parent=31 // pred_fallthru
          _
        %s546 = sand.u32 %s132, 1
        %s547 = scalar_lea.sflag [#allocation5], %s546
        %s548 = sand.u32 %s132, 1
        %s549 = smul.addr %s548, 64
        %s550 = scalar_lea.vmem [#allocation9], %s549
        // Predicated region
        $region53: #{tpu_custom_call.1} parent=31 // pred_check
          %p551 = pneg %p142
        $region54: #{tpu_custom_call.1} parent=31 // pred_check_branch
          %553 = sbr.rel (%p551) target = $region56
        $region55: #{tpu_custom_call.1} parent=31 // pred_region
          %s554 = smul.u32 2, %s26
          %s555 = smul.u32 4, %s27
          %s557 = ssub.s32 1024, 1024
          %558 = vsyncadd %s547, %s557
          %s559 = smul.addr %s554, 8
          %s560 = sadd.s32 %s555, %s559
          %s561 = smul.addr %s560, 128
          %s562 = scalar_lea.hbm %s3, %s561
          %s563 = sshll.u32 %s550, 4
          %s564 = int_to_ptr.vmem [resolvable:$true] %s563
          %569 = dma.vmem_to_hbm [thread:$0]  %s564, 1024, %s562, %s547, 512, 1024, 32
        $region56: #{tpu_custom_call.1} parent=31 // pred_fallthru
          _
      $region32: #{tpu_custom_call.1} parent=5 // pred_fallthru
        _
      %p570 = scmp.le.s32.totalorder 2, %s16
      // Predicated region
      $region57: #{tpu_custom_call.1} parent=5 // pred_check
        %p571 = pneg %p570
      $region58: #{tpu_custom_call.1} parent=5 // pred_check_branch
        %573 = sbr.rel (%p571) target = $region60
      $region59: #{tpu_custom_call.1} parent=5 // pred_region
        %s574 = ssub.s32 %s16, 2
        // Predicated region
        $region61: #{tpu_custom_call.1} parent=59 // pred_check
          %p575 = pneg %p148
        $region62: #{tpu_custom_call.1} parent=59 // pred_check_branch
          %577 = sbr.rel (%p575) target = $region64
        $region63: #{tpu_custom_call.1} parent=59 // pred_region
          %s578 = sand.u32 %s133, 1
          %s579 = scalar_lea.sflag [#allocation5], %s578
          %s580 = sand.u32 %s133, 1
          %s581 = smul.addr %s580, 64
          %s582 = scalar_lea.vmem [#allocation9], %s581
          %583 = dma.done %s579, 1024
        $region64: #{tpu_custom_call.1} parent=59 // pred_fallthru
          _
      $region60: #{tpu_custom_call.1} parent=5 // pred_fallthru
        _
    $region6: #{tpu_custom_call.1} parent=1 // loop_footer
      %s20 = sadd.s32 1, %s16
    $region7: #{tpu_custom_call.1} parent=1 // loop_footer_branch
      %15 = sbr.rel target = $region3
    $region8: #{tpu_custom_call.1} parent=1 // loop_exit
      _
    %584 = vsyncpa [#allocation4], 1
    %s585 = scalar_lea.sflag [#allocation4], 1
    %586 = vsyncpa %s585, 1
    %587 = vsyncpa [#allocation7], 1
    %s588 = scalar_lea.sflag [#allocation7], 1
    %589 = vsyncpa %s588, 1
    %590 = vsyncpa [#allocation5], 1
    %s591 = scalar_lea.sflag [#allocation5], 1
    %592 = vsyncpa %s591, 1

</llo_original>
